<compile_context>
chip_gen: v6e
topology: v6e:2x2x1
jax: 0.10.0
libtpu: 0.0.40
codegen_flags: <defaults>
</compile_context>

<pallas_src>
import math
import functools

import numpy as np
import jax
import jax.numpy as jnp
from jax import lax
from jax.experimental import pallas as pl
from jax.experimental.pallas import tpu as pltpu


# --------------------------- VMEM limit helper -------------------------------
def _pick_vmem_limit(block_bytes_total):
    """Conservative per-call VMEM request: double-buffered blocks + headroom,
    capped well below the physical capacity of the current generation."""
    try:
        cap = int(pltpu.get_tpu_info().vmem_capacity_bytes)
    except Exception:
        cap = 64 * 1024 * 1024  # smallest per-core VMEM across v5e/v6e/v7x
    if cap <= 0:
        cap = 64 * 1024 * 1024
    # x4 fudge for (sublane, lane) tile padding, x2 for double buffering.
    want = 8 * int(block_bytes_total) + (8 << 20)
    return int(min(max(32 << 20, want), int(0.75 * cap)))


# ----------------------------- linear kernels --------------------------------
def _linear_bias_kernel(x_ref, w_ref, b_ref, o_ref):
    acc = jnp.dot(x_ref[...].astype(jnp.bfloat16), w_ref[...],
                  preferred_element_type=jnp.float32)
    o_ref[...] = (acc + b_ref[...]).astype(o_ref.dtype)


def _linear_nobias_kernel(x_ref, w_ref, o_ref):
    o_ref[...] = jnp.dot(x_ref[...].astype(jnp.bfloat16), w_ref[...],
                         preferred_element_type=jnp.float32).astype(o_ref.dtype)


def linear(x2d, w_t, b=None, *, out_dtype=jnp.float32, block_rows=1024):
    """y = x @ W (+ b).  x2d: (rows, in_f); w_t: (in_f, out_f) bf16 (pre-transposed)."""
    rows, in_f = x2d.shape
    out_f = w_t.shape[1]
    br = min(rows, block_rows)
    grid = (pl.cdiv(rows, br),)

    x_spec = pl.BlockSpec((br, in_f), lambda i: (i, 0))
    w_spec = pl.BlockSpec((in_f, out_f), lambda i: (0, 0))     # resident weight
    o_spec = pl.BlockSpec((br, out_f), lambda i: (i, 0))
    out_shape = jax.ShapeDtypeStruct((rows, out_f), out_dtype)

    block_bytes = (br * in_f * x2d.dtype.itemsize
                   + in_f * out_f * 2
                   + br * out_f * jnp.dtype(out_dtype).itemsize
                   + out_f * 4)
    cparams = pltpu.CompilerParams(
        dimension_semantics=("parallel",),
        vmem_limit_bytes=_pick_vmem_limit(block_bytes))

    if b is None:
        return pl.pallas_call(
            _linear_nobias_kernel, out_shape=out_shape, grid=grid,
            in_specs=[x_spec, w_spec], out_specs=o_spec,
            compiler_params=cparams)(x2d, w_t)
    return pl.pallas_call(
        _linear_bias_kernel, out_shape=out_shape, grid=grid,
        in_specs=[x_spec, w_spec, pl.BlockSpec((1, out_f), lambda i: (0, 0))],
        out_specs=o_spec,
        compiler_params=cparams)(x2d, w_t, b.reshape(1, out_f))


# --------------------------- rel_shift helpers --------------------------------
def _rel_shift(bd, S, use_roll):
    """bd: (S, 2S-1) f32 -> (S, S) with out[i, j] = bd[i, (S-1-i) + j]."""
    if use_roll:
        # Per-row rotate amount = S + i  (== i - (S-1) mod 2S-1): one strided
        # XLU rotate, then a static lane slice.
        return pltpu.roll(bd, shift=S, axis=1, stride=1, stride_axis=0)[:, :S]
    # Fallback: O(log S) rotate-and-select ladder (no O(S) unroll, no pltpu.roll).
    n = bd.shape[1]
    row = lax.broadcasted_iota(jnp.int32, (S, 1), 0)
    left = (S - 1) - row                       # left-rotate amount per row
    cur = bd
    k = 0
    while (1 << k) < S:
        step = 1 << k
        rotated = jnp.concatenate([cur[:, step:], cur[:, :step]], axis=1)
        take = ((left >> k) & 1) == 1
        cur = jnp.where(take, rotated, cur)
        k += 1
    del n
    return cur[:, :S]


_ROLL_PROBE = {}


def _strided_roll_ok():
    """Probe (once) that pltpu.roll's strided semantics match what we rely on."""
    if "ok" in _ROLL_PROBE:
        return _ROLL_PROBE["ok"]
    S = 8
    n = 2 * S - 1
    x = jnp.arange(S * n, dtype=jnp.float32).reshape(S, n)

    def probe_kernel(x_ref, o_ref):
        o_ref[...] = pltpu.roll(x_ref[...], shift=S, axis=1, stride=1, stride_axis=0)

    ok = False
    try:
        got = pl.pallas_call(
            probe_kernel, out_shape=jax.ShapeDtypeStruct((S, n), jnp.float32))(x)
        got = np.asarray(jax.block_until_ready(got))
        x_np = np.asarray(x)
        want = np.stack([np.roll(x_np[i], S + i) for i in range(S)])
        ok = bool(np.array_equal(got, want))
    except Exception:
        ok = False
    _ROLL_PROBE["ok"] = ok
    return ok


# --------------------------- attention kernel --------------------------------
def _attn_kernel(H, scaling, use_roll,
                 qkv_ref, p_ref, u_ref, vb_ref, mask_ref, o_ref):
    S = qkv_ref.shape[0]
    E = qkv_ref.shape[3]
    D = E // H

    u_all = u_ref[...]        # (H, D) f32
    vb_all = vb_ref[...]      # (H, D) f32
    mask_add = mask_ref[0]    # (1, S) f32 additive mask (0 / -1e30)

    outs = []
    for h in range(H):
        lo, hi = h * D, (h + 1) * D
        q_h = qkv_ref[:, 0, 0, lo:hi].astype(jnp.float32)   # (S, D)
        k_h = qkv_ref[:, 0, 1, lo:hi]                       # (S, D) bf16
        v_h = qkv_ref[:, 0, 2, lo:hi]                       # (S, D) bf16
        p_h = p_ref[:, lo:hi]                               # (N, D) bf16

        u_h = u_all[h:h + 1, :]                             # (1, D) f32
        vbias_h = vb_all[h:h + 1, :]

        # fold the 1/sqrt(D) scaling into the small (S, D) operands, cast bf16
        qu = ((q_h + u_h) * scaling).astype(jnp.bfloat16)
        qv = ((q_h + vbias_h) * scaling).astype(jnp.bfloat16)

        # matrix_ac = (q + u) @ k^T  : (S, S) f32 accumulate
        ac = lax.dot_general(qu, k_h, (((1,), (1,)), ((), ())),
                             preferred_element_type=jnp.float32)
        # matrix_bd = (q + v) @ p^T  : (S, 2S-1)
        bd = lax.dot_general(qv, p_h, (((1,), (1,)), ((), ())),
                             preferred_element_type=jnp.float32)

        bd_sh = _rel_shift(bd, S, use_roll)                 # (S, S)

        scores = ac + bd_sh + mask_add                      # additive key mask
        m = jnp.max(scores, axis=-1, keepdims=True)
        e = jnp.exp(scores - m)
        w = e * pl.reciprocal(jnp.sum(e, axis=-1, keepdims=True), approx=True)

        # TODO(synk): dropout on attention weights not implemented (p=0.0 / eval).
        out_h = jnp.dot(w.astype(jnp.bfloat16), v_h,
                        preferred_element_type=jnp.float32)  # (S, D)
        outs.append(out_h)

    # lane-dense (S, E) output block
    o_ref[0] = jnp.concatenate(outs, axis=-1).astype(o_ref.dtype)


# ------------------------------- forward ------------------------------------
def rel_pos_mha(x, pos_emb, params, key_padding_mask=None):
    S, B, E = x.shape
    H = params["num_heads"]
    assert E % H == 0
    D = E // H
    N = 2 * S - 1
    assert pos_emb.shape[-2] == N and pos_emb.shape[-1] == E
    scaling = float(D) ** (-0.5)

    # in_proj: (S*B, E) -> (S*B, 3E), stored bf16; free reshape to (S, B, 3, E)
    qkv = linear(x.reshape(S * B, E), params["in_proj_w_t"], params["in_proj_b"],
                 out_dtype=jnp.bfloat16)
    qkv = qkv.reshape(S, B, 3, E)

    # linear_pos (no bias): (N, E) bf16, consumed in its natural layout
    p = linear(pos_emb.reshape(N, E), params["linear_pos_w_t"], None,
               out_dtype=jnp.bfloat16)

    u = params["pos_bias_u"]      # (H, D) f32
    vb = params["pos_bias_v"]     # (H, D) f32

    if key_padding_mask is None:
        mask_add = jnp.zeros((B, 1, S), jnp.float32)
    else:
        mask_add = jnp.where(key_padding_mask.reshape(B, 1, S),
                             -1e30, 0.0).astype(jnp.float32)

    use_roll = _strided_roll_ok()
    kernel = functools.partial(_attn_kernel, H, scaling, use_roll)

    block_bytes = (S * 3 * E * 2          # qkv block (bf16)
                   + N * E * 2            # resident p (bf16)
                   + 2 * H * D * 4        # pos biases
                   + S * 4                # mask
                   + S * E * 4)           # output block
    # TODO(synk): for production S (~1k) and B==1, tile the query dimension
    # flash-style (grid over q blocks) so v7x's 2 TensorCores both get work
    # and the per-step live set stays inside 64 MiB.
    attn = pl.pallas_call(
        kernel,
        out_shape=jax.ShapeDtypeStruct((B, S, E), jnp.float32),
        grid=(B,),
        in_specs=[
            pl.BlockSpec((S, 1, 3, E), lambda b: (0, b, 0, 0)),  # qkv (per batch)
            pl.BlockSpec((N, E), lambda b: (0, 0)),              # p (resident)
            pl.BlockSpec((H, D), lambda b: (0, 0)),              # pos_bias_u
            pl.BlockSpec((H, D), lambda b: (0, 0)),              # pos_bias_v
            pl.BlockSpec((1, 1, S), lambda b: (b, 0, 0)),        # additive mask
        ],
        out_specs=pl.BlockSpec((1, S, E), lambda b: (b, 0, 0)),  # lane-dense
        compiler_params=pltpu.CompilerParams(
            dimension_semantics=("parallel",),
            vmem_limit_bytes=_pick_vmem_limit(block_bytes)),
    )(qkv, p, u, vb, mask_add)

    # out_proj on (B*S, E) rows (attention output is already lane-dense rows)
    out = linear(attn.reshape(B * S, E), params["out_proj_w_t"],
                 params["out_proj_b"], out_dtype=jnp.float32)
    # TODO(synk): this final (B,S,E)->(S,B,E) relayout is the one remaining
    # wrapper-side HBM transpose; it could be folded into a q-block-gridded
    # out_proj that writes (s_blk, B, E) output blocks directly.
    return out.reshape(B, S, E).transpose(1, 0, 2)


# --------------------------- params / reference ------------------------------
def init_params(key, embed_dim, num_heads):
    D = embed_dim // num_heads
    k1, k2, k3, k4, k5 = jax.random.split(key, 5)

    def xavier(k, shape):
        fan_out, fan_in = shape
        bound = math.sqrt(6.0 / (fan_in + fan_out))
        return jax.random.uniform(k, shape, jnp.float32, -bound, bound)

    return {
        "num_heads": num_heads,
        "in_proj_w": xavier(k1, (3 * embed_dim, embed_dim)),
        "in_proj_b": jnp.zeros((3 * embed_dim,), jnp.float32),
        "out_proj_w": xavier(k2, (embed_dim, embed_dim)),
        "out_proj_b": jnp.zeros((embed_dim,), jnp.float32),
        "linear_pos_w": xavier(k3, (embed_dim, embed_dim)),
        "pos_bias_u": xavier(k4, (num_heads, D)),
        "pos_bias_v": xavier(k5, (num_heads, D)),
    }


def pack_params(params):
    """One-time repacking: weights pre-transposed to (in_f, out_f) and cast bf16."""
    return {
        "num_heads": params["num_heads"],
        "in_proj_w_t": jnp.asarray(params["in_proj_w"]).T.astype(jnp.bfloat16),
        "in_proj_b": jnp.asarray(params["in_proj_b"], jnp.float32),
        "out_proj_w_t": jnp.asarray(params["out_proj_w"]).T.astype(jnp.bfloat16),
        "out_proj_b": jnp.asarray(params["out_proj_b"], jnp.float32),
        "linear_pos_w_t": jnp.asarray(params["linear_pos_w"]).T.astype(jnp.bfloat16),
        "pos_bias_u": jnp.asarray(params["pos_bias_u"], jnp.float32),
        "pos_bias_v": jnp.asarray(params["pos_bias_v"], jnp.float32),
    }


def reference(x, pos_emb, params, key_padding_mask):
    S, B, E = x.shape
    H = params["num_heads"]
    D = E // H
    N = 2 * S - 1
    scaling = float(D) ** (-0.5)
    qkv = x @ params["in_proj_w"].T + params["in_proj_b"]
    q, k, v = jnp.split(qkv, 3, axis=-1)
    q = q.reshape(S, B, H, D).transpose(1, 2, 0, 3)
    k = k.reshape(S, B, H, D).transpose(1, 2, 0, 3)
    v = v.reshape(S, B, H, D).transpose(1, 2, 0, 3)
    p = (pos_emb.reshape(N, E) @ params["linear_pos_w"].T).reshape(N, H, D)
    qu = q + params["pos_bias_u"][None, :, None, :]
    qv = q + params["pos_bias_v"][None, :, None, :]
    ac = jnp.einsum("bhsd,bhtd->bhst", qu, k)
    bd = jnp.einsum("bhsd,nhd->bhsn", qv, p)
    idx = (S - 1) - jnp.arange(S)[:, None] + jnp.arange(S)[None, :]
    bd_sh = jnp.take_along_axis(bd, idx[None, None], axis=-1)
    scores = (ac + bd_sh) * scaling
    if key_padding_mask is not None:
        scores = jnp.where(key_padding_mask[:, None, None, :], -jnp.inf, scores)
    w = jax.nn.softmax(scores, axis=-1)
    out = jnp.einsum("bhst,bhtd->bhsd", w, v)
    out = out.transpose(2, 0, 1, 3).reshape(S, B, E)
    return out @ params["out_proj_w"].T + params["out_proj_b"]


if __name__ == "__main__":
    S, B, E, H = 8, 2, 32, 4  # seq_len, batch, embed_dim, num_heads
    key = jax.random.PRNGKey(0)
    kp, kx, ke = jax.random.split(key, 3)

    params = init_params(kp, E, H)
    fwd_params = pack_params(params)

    x = jax.random.normal(kx, (S, B, E), jnp.float32)
    pos_emb = jax.random.normal(ke, (1, 2 * S - 1, E), jnp.float32)
    key_padding_mask = jnp.zeros((B, S), bool).at[1, S - 2:].set(True)

    out = rel_pos_mha(x, pos_emb, fwd_params, key_padding_mask)
    out = jax.block_until_ready(out)
    assert out.shape == (S, B, E)

    ref = reference(x, pos_emb, params, key_padding_mask)
    np.testing.assert_allclose(np.asarray(out), np.asarray(ref),
                               rtol=3e-2, atol=3e-2)
    print("KERNEL_OK")
</pallas_src>

<mosaic_0001>
module attributes {stable_mosaic.version = 11 : i64} {
  func.func @_linear_bias_kernel(%arg0: i32, %arg1: memref<16x32xf32, #tpu.memory_space<vmem>>, %arg2: memref<32x96xbf16, #tpu.memory_space<vmem>>, %arg3: memref<1x96xf32, #tpu.memory_space<vmem>>, %arg4: memref<16x96xbf16, #tpu.memory_space<vmem>>) attributes {dimension_semantics = [#tpu.dimension_semantics<parallel>], iteration_bounds = array<i64: 1>, scalar_prefetch = 0 : i64, scratch_operands = 0 : i64, tpu.core_type = #tpu.core_type<tc>, window_params = [{transform_indices = @transform_0, window_bounds = array<i64: 16, 32>}, {pipeline_mode = #tpu.pipeline_mode<synchronous>, transform_indices = @transform_1, window_bounds = array<i64: 32, 96>}, {pipeline_mode = #tpu.pipeline_mode<synchronous>, transform_indices = @transform_2, window_bounds = array<i64: 1, 96>}, {transform_indices = @transform_3, window_bounds = array<i64: 16, 96>}]} {
    %c0 = arith.constant 0 : index
    %c0_0 = arith.constant 0 : index
    %0 = vector.load %arg1[%c0, %c0_0] : memref<16x32xf32, #tpu.memory_space<vmem>>, vector<16x32xf32>
    %1 = arith.truncf %0 : vector<16x32xf32> to vector<16x32xbf16>
    %c0_1 = arith.constant 0 : index
    %c0_2 = arith.constant 0 : index
    %2 = vector.load %arg2[%c0_1, %c0_2] : memref<32x96xbf16, #tpu.memory_space<vmem>>, vector<32x96xbf16>
    %cst = arith.constant dense<0.000000e+00> : vector<16x96xf32>
    %3 = tpu.matmul %1, %2, %cst {dimension_numbers = #tpu.dot_dimension_numbers<[1], [0], [0], [1], [0, 0, 1, 1], [], []>} : vector<16x32xbf16>, vector<32x96xbf16>, vector<16x96xf32> -> vector<16x96xf32>
    %c0_3 = arith.constant 0 : index
    %c0_4 = arith.constant 0 : index
    %4 = vector.load %arg3[%c0_3, %c0_4] : memref<1x96xf32, #tpu.memory_space<vmem>>, vector<1x96xf32>
    %5 = vector.broadcast %4 : vector<1x96xf32> to vector<16x96xf32>
    %6 = arith.addf %3, %5 : vector<16x96xf32>
    %7 = arith.truncf %6 : vector<16x96xf32> to vector<16x96xbf16>
    %c0_5 = arith.constant 0 : index
    %c0_6 = arith.constant 0 : index
    %8 = vector.load %arg4[%c0_5, %c0_6] : memref<16x96xbf16, #tpu.memory_space<vmem>>, vector<16x96xbf16>
    tpu.vector_store %arg4[%c0_5, %c0_6], %7 {strides = array<i32>} : memref<16x96xbf16, #tpu.memory_space<vmem>>, vector<16x96xbf16>,
    return
  }
  func.func @transform_0(%arg0: i32) -> (i32, i32) {
    %c0_i32 = arith.constant 0 : i32
    %c0_i32_0 = arith.constant 0 : i32
    return %arg0, %c0_i32 : i32, i32
  }
  func.func @transform_1(%arg0: i32) -> (i32, i32) {
    %c0_i32 = arith.constant 0 : i32
    %c0_i32_0 = arith.constant 0 : i32
    %c0_i32_1 = arith.constant 0 : i32
    return %c0_i32, %c0_i32_0 : i32, i32
  }
  func.func @transform_2(%arg0: i32) -> (i32, i32) {
    %c0_i32 = arith.constant 0 : i32
    %c0_i32_0 = arith.constant 0 : i32
    %c0_i32_1 = arith.constant 0 : i32
    return %c0_i32, %c0_i32_0 : i32, i32
  }
  func.func @transform_3(%arg0: i32) -> (i32, i32) {
    %c0_i32 = arith.constant 0 : i32
    %c0_i32_0 = arith.constant 0 : i32
    return %arg0, %c0_i32 : i32, i32
  }
}

</mosaic_0001>

<llo_original>
// kernel: tpu_custom_call.1
$region0: #{tpu_custom_call.1}
  #allocation0 [shape = 'u32[]', space=smem, size = 0x4, offset = 0x4, fixed_abs, tag = 'smem constant byte address 0x4 - core index']
  #allocation1 [shape = 'u32[144,128]{1,0:T(1,128)}', space=vmem, size = 0x12000, scoped, tag = 'internal scratch']
  %s0 = inlined_call_operand.hbm [shape: f32[16,32], index: 0, kind: input, shape index: {}]
  %s1 = inlined_call_operand.hbm [shape: bf16[32,96], index: 1, kind: input, shape index: {}]
  %s2 = inlined_call_operand.vmem [shape: f32[1,96], index: 2, kind: input, shape index: {}]
  %s3 = inlined_call_operand.hbm [shape: bf16[16,96], index: 3, kind: output, shape index: {}]
  %s4 = sld [smem:[#allocation0]]
  $region30: #{tpu_custom_call.1} parent=0
    _
  %s6 = ssub.s32 1, %s4
  %s7 = scalar_select 0, %s6, %s4
  $region1: #{tpu_custom_call.1} parent=0
    #allocation2 [shape = 'u8[8192]{0}', space=vmem, size = 0x2000, scoped, tag = 'input window, operand 0, single buffered']
    #allocation3 [shape = 's32[1]{0}', space=sflag, size = 0x4, scoped, tag = 'scoped memory for tpu_custom_call.1']
    #allocation4 [shape = 's32[1]{0}', space=sflag, size = 0x4, scoped, tag = 'scoped memory for tpu_custom_call.1']
    #allocation5 [shape = 'u8[8192]{0}', space=vmem, size = 0x2000, scoped, tag = 'input window, operand 1, single buffered']
    #allocation6 [shape = 's32[1]{0}', space=sflag, size = 0x4, scoped, tag = 'scoped memory for tpu_custom_call.1']
    #allocation7 [shape = 'u8[4096]{0}', space=vmem, size = 0x1000, scoped, tag = 'output window, operand 0, single buffered']
    %8 = vsyncpa [#allocation3], 0
    %9 = vsyncpa [#allocation6], 0
    %10 = vsyncpa [#allocation4], 0
    // Predicated region
    $region2: #{tpu_custom_call.1} parent=1 // pred_check
      _
    $region3: #{tpu_custom_call.1} parent=1 // pred_check_branch
      %12 = sbr.rel (0) target = $region5
    $region4: #{tpu_custom_call.1} parent=1 // pred_region
      %s14 = ssub.s32 256, 256
      %15 = vsyncadd [#allocation3], %s14
      %s16 = sshll.u32 [#allocation2], 4
      %s17 = int_to_ptr.vmem [resolvable:$true] %s16
      %22 = dma.hbm_to_vmem [thread:$0]  %s0, 256, %s17, [#allocation3], 128, 128, 8
    $region5: #{tpu_custom_call.1} parent=1 // pred_fallthru
      _
    // Predicated region
    $region6: #{tpu_custom_call.1} parent=1 // pred_check
      _
    $region7: #{tpu_custom_call.1} parent=1 // pred_check_branch
      %24 = sbr.rel (0) target = $region9
    $region8: #{tpu_custom_call.1} parent=1 // pred_region
      %s26 = ssub.s32 256, 256
      %27 = vsyncadd [#allocation6], %s26
      %s28 = sshll.u32 [#allocation5], 4
      %s29 = int_to_ptr.vmem [resolvable:$true] %s28
      %34 = dma.hbm_to_vmem [thread:$0]  %s1, 256, %s29, [#allocation6], 64, 64, 4
    $region9: #{tpu_custom_call.1} parent=1 // pred_fallthru
      _
    // Predicated region
    $region10: #{tpu_custom_call.1} parent=1 // pred_check
      _
    $region11: #{tpu_custom_call.1} parent=1 // pred_check_branch
      %36 = sbr.rel (0) target = $region13
    $region12: #{tpu_custom_call.1} parent=1 // pred_region
      _
    $region13: #{tpu_custom_call.1} parent=1 // pred_fallthru
      _
    // Predicated region
    $region14: #{tpu_custom_call.1} parent=1 // pred_check
      _
    $region15: #{tpu_custom_call.1} parent=1 // pred_check_branch
      %38 = sbr.rel (0) target = $region17
    $region16: #{tpu_custom_call.1} parent=1 // pred_region
      %39 = dma.done [#allocation3], 256
    $region17: #{tpu_custom_call.1} parent=1 // pred_fallthru
      _
    // Predicated region
    $region18: #{tpu_custom_call.1} parent=1 // pred_check
      _
    $region19: #{tpu_custom_call.1} parent=1 // pred_check_branch
      %41 = sbr.rel (0) target = $region21
    $region20: #{tpu_custom_call.1} parent=1 // pred_region
      %42 = dma.done [#allocation6], 256
    $region21: #{tpu_custom_call.1} parent=1 // pred_fallthru
      _
    %v44 = vld [vmem:[#allocation2] sm:$0xff]
    %v45 = vld [vmem:[#allocation2 + $0x8] sm:$0xff]
    %v46 = vpack.c.bf16 %v45, %v44
    %v47 = vld [vmem:[#allocation5] sm:$0xf]
    %v48 = vld [vmem:[#allocation5 + $0x4] sm:$0xf]
    %v49 = vld [vmem:[#allocation5 + $0x8] sm:$0xf]
    %v50 = vld [vmem:[#allocation5 + $0xc] sm:$0xf]
    %v51 = vld [vmem:[%s2] sm:$0x1]
    %v53 = vlaneseq
    %v54 = vshrl.u32 %v53, 7
    %v55 = vsub.s32 0, %v54
    %v56 = vrot.slane %v51, %v55
    %v62 = vunpack.c.l.b16 %v47
    %v63 = vunpack.c.l.b16 %v48
    %v64 = vunpack.c.l.b16 %v49
    %v65 = vunpack.c.l.b16 %v50
    %v66 = vpack.c.b16 %v63, %v62
    %v67 = vpack.c.b16 %v65, %v64
    %vm70 = vcmask 261120
    %v72 = vsel %vm70, %v46, 0
    %74 = vmatprep.subr.bf16.mxu0 0
    %75 = vmatpush1.bf16.msra.mxu0 0
    %76 = vmatprep.subr.bf16.mxu0 0
    %77 = vmatpush1.bf16.msra.mxu0 0
    %78 = vmatprep.subr.bf16.mxu0 0
    %79 = vmatpush1.bf16.msra.mxu0 0
    %80 = vmatprep.subr.bf16.mxu0 0
    %81 = vmatpush1.bf16.msra.mxu0 0
    %82 = vmatprep.subr.bf16.mxu0 0
    %83 = vmatpush1.bf16.msra.mxu0 0
    %84 = vmatprep.subr.bf16.mxu0 0
    %85 = vmatpush1.bf16.msra.mxu0 0
    %86 = vmatprep.subr.bf16.mxu0 0
    %87 = vmatpush1.bf16.msra.mxu0 %v67
    %88 = vmatprep.subr.bf16.mxu0 0
    %89 = vmatpush1.bf16.msra.mxu0 %v66
    %90 = vmatprep.subr.bf16.mxu0 0
    %91 = vmatpush2.bf16.msra.mxu0 0
    %92 = vmatprep.subr.bf16.mxu0 0
    %93 = vmatpush2.bf16.msra.mxu0 0
    %94 = vmatprep.subr.bf16.mxu0 0
    %95 = vmatpush2.bf16.msra.mxu0 0
    %96 = vmatprep.subr.bf16.mxu0 0
    %97 = vmatpush2.bf16.msra.mxu0 0
    %98 = vmatprep.subr.bf16.mxu0 0
    %99 = vmatpush2.bf16.msra.mxu0 0
    %100 = vmatprep.subr.bf16.mxu0 0
    %101 = vmatpush2.bf16.msra.mxu0 0
    %102 = vmatprep.subr.bf16.mxu0 0
    %103 = vmatpush2.bf16.msra.mxu0 0
    %104 = vmatprep.subr.bf16.mxu0 0
    %105 = vmatpush2.bf16.msra.mxu0 0
    %106 = vmatprep.mubr.bf16.mxu0 0
    %107 = vmatmul.mubr.bf16.gmra.mxu0 %v72
    %v108 = vpop.f32.mrf.mxu0
    %v109 = vadd.f32 %v56, %v108
    %v110 = vpop.f32.mrf.mxu0
    %v111 = vpop.f32.mrf.mxu0
    %v112 = vadd.f32 %v56, %v111
    %v113 = vpop.f32.mrf.mxu0
    %114 = vdwg.mxu0
    %v115 = vpack.c.bf16 %v112, %v109
    %v117 = vunpack.c.l.b16 %v115
    %v118 = vunpack.c.h.b16 %v115
    %v119 = vpack.c.b16 %v117, %v117
    %v120 = vpack.c.b16 %v118, %v118
    %vm123 = vcmask 781312
    %124 = vst.msk [vmem:[#allocation7] sm:$0xf] %vm123, %v119
    %125 = vst.msk [vmem:[#allocation7 + $0x4] sm:$0xf] %vm123, %v120
    // Predicated region
    $region22: #{tpu_custom_call.1} parent=1 // pred_check
      _
    $region23: #{tpu_custom_call.1} parent=1 // pred_check_branch
      %127 = sbr.rel (0) target = $region25
    $region24: #{tpu_custom_call.1} parent=1 // pred_region
      %s129 = ssub.s32 128, 128
      %130 = vsyncadd [#allocation4], %s129
      %s131 = sshll.u32 [#allocation7], 4
      %s132 = int_to_ptr.vmem [resolvable:$true] %s131
      %137 = dma.vmem_to_hbm [thread:$0]  %s132, 128, %s3, [#allocation4], 64, 64, 4
    $region25: #{tpu_custom_call.1} parent=1 // pred_fallthru
      _
    // Predicated region
    $region26: #{tpu_custom_call.1} parent=1 // pred_check
      _
    $region27: #{tpu_custom_call.1} parent=1 // pred_check_branch
      %139 = sbr.rel (0) target = $region29
    $region28: #{tpu_custom_call.1} parent=1 // pred_region
      %140 = dma.done [#allocation4], 128
    $region29: #{tpu_custom_call.1} parent=1 // pred_fallthru
      _
    %141 = vsyncpa [#allocation3], 1
    %142 = vsyncpa [#allocation6], 1
    %143 = vsyncpa [#allocation4], 1

</llo_original>
